<compile_context>
chip_gen: v7x
topology: tpu7x:2x2x1
jax: 0.10.0
libtpu: 0.0.40
codegen_flags: <defaults>
</compile_context>

<pallas_src>
import jax
import jax.numpy as jnp
from jax import lax
from jax.experimental import pallas as pl
from jax.experimental.pallas import tpu as pltpu


def _vmem_capacity_bytes():
    # Generation-aware per-core VMEM (v5e/v6e: 128 MiB, v7x: 64 MiB).
    try:
        cap = int(pltpu.get_tpu_info().vmem_capacity_bytes)
        if cap > 0:
            return cap
    except Exception:
        pass
    return 64 * 1024 * 1024  # conservative fallback (v7x per-core size)


def _logreg_kernel(x_ref, w_ref, b_ref, o_ref):
    # x_ref: (TB, Fp) VMEM, w_ref: (P, Fp) VMEM, b_ref: (1,) SMEM f32,
    # o_ref: (1, P, TB) VMEM f32 (lane-dense output slab).
    logits = lax.dot_general(
        w_ref[...], x_ref[...],
        dimension_numbers=(((1,), (1,)), ((), ())),
        preferred_element_type=jnp.float32,
    )                                        # (P, TB)
    probs = jax.nn.sigmoid(logits + b_ref[0])
    o_ref[...] = probs[None, :, :].astype(o_ref.dtype)


def logreg_forward(x, w, b, *, target_tile_bytes=4 * 1024 * 1024):
    """sigmoid(x @ w.T + b).  x: (B, F); w: (1, F) (torch layout); b: (1,)."""
    B, F = x.shape
    itemsize = jnp.dtype(x.dtype).itemsize

    # ---- lane packing for small F (free row-major reshape of x) -------------
    pack = 1
    if 0 < F < 128 and 128 % F == 0 and (B * F) % 128 == 0:
        pack = 128 // F
    Fp = F * pack                  # packed feature (lane) width
    Bp = B // pack                 # packed batch rows
    xp = x.reshape(Bp, Fp) if pack > 1 else x

    w_flat = jnp.asarray(w).reshape(F)
    if pack > 1:
        # Row r of w_block holds w at lanes [r*F, (r+1)*F), zeros elsewhere.
        w_block = (jnp.eye(pack, dtype=jnp.float32)[:, :, None]
                   * w_flat.astype(jnp.float32)[None, None, :]).reshape(pack, Fp)
    else:
        w_block = w_flat.reshape(1, F)
    w_block = w_block.astype(x.dtype)
    b1 = jnp.asarray(b, jnp.float32).reshape(1)

    # ---- batch-tile sizing: ~target_tile_bytes of real x per grid step ------
    vmem_cap = _vmem_capacity_bytes()
    lane_pad = max(128, -(-Fp // 128) * 128)    # VMEM lane padding of the x tile
    row_vmem = lane_pad * itemsize
    row_hbm = max(Fp * itemsize, 1)

    tbp = max(8, (int(target_tile_bytes) // row_hbm) // 8 * 8)
    x_budget = int(vmem_cap * 0.6)              # budget for double-buffered x
    while tbp > 8 and 2 * tbp * row_vmem > x_budget:
        tbp //= 2
    tbp = max(8, tbp // 8 * 8)                  # keep multiple of 8 sublanes
    if tbp >= Bp:
        tbp = Bp                                # single full-extent block
    num_tiles = -(-Bp // tbp)                   # ragged last block: Pallas pads
    # TODO(synk): for F so wide that even tbp=8 overflows VMEM, add a reduction
    # grid axis over F with an f32 accumulator instead of shrinking the tile.

    # ---- VMEM limit: cover double buffers, stay under per-core physical -----
    w_rows = -(-pack // 8) * 8
    out_lanes = -(-tbp // 128) * 128
    vmem_needed = (2 * tbp * row_vmem            # x double buffer
                   + 2 * w_rows * row_vmem       # weight (double buffered)
                   + 2 * w_rows * out_lanes * 4  # output double buffer
                   + (2 << 20))                  # slack
    vmem_limit = int(min(vmem_cap * 85 // 100,
                         max(vmem_needed, 32 * 1024 * 1024)))

    out = pl.pallas_call(
        _logreg_kernel,
        out_shape=jax.ShapeDtypeStruct((num_tiles, pack, tbp), jnp.float32),
        grid_spec=pltpu.PrefetchScalarGridSpec(
            num_scalar_prefetch=0,
            grid=(num_tiles,),
            in_specs=[
                pl.BlockSpec((tbp, Fp), lambda i: (i, 0)),    # x tile (pipelined)
                # Resident weight block.  TODO(synk): for very wide F, pin to a
                # single buffer (pipeline_mode=pl.Buffered(1)) to save VMEM.
                pl.BlockSpec((pack, Fp), lambda i: (0, 0)),
                pl.BlockSpec(memory_space=pltpu.MemorySpace.SMEM),  # bias scalar
            ],
            out_specs=pl.BlockSpec((1, pack, tbp), lambda i: (i, 0, 0)),
        ),
        compiler_params=pltpu.CompilerParams(
            # "parallel" shards the batch axis across v7x's two TensorCores;
            # free on single-core v5e/v6e.
            dimension_semantics=("parallel",),
            vmem_limit_bytes=vmem_limit,
        ),
        cost_estimate=pl.CostEstimate(
            flops=2 * num_tiles * tbp * pack * Fp,
            transcendentals=num_tiles * tbp * pack,
            bytes_accessed=(itemsize * num_tiles * tbp * Fp
                            + 4 * (pack * Fp + 1 + num_tiles * tbp * pack)),
        ),
    )(xp, w_block, b1)

    # out[tile, r, t] = prob of original row tile*tbp*pack + t*pack + r.
    probs = out.transpose(0, 2, 1).reshape(-1)[:B].reshape(B, 1)
    return probs


if __name__ == "__main__":
    key = jax.random.PRNGKey(0)
    k_w, k_b, k1, k2, k3 = jax.random.split(key, 5)

    n_features = 32
    bound = 1.0 / (n_features ** 0.5)
    # torch.nn.Linear layout: weight (1, n_features), bias (1,)
    w = jax.random.uniform(k_w, (1, n_features), minval=-bound, maxval=bound,
                           dtype=jnp.float32)
    b = jax.random.uniform(k_b, (1,), minval=-bound, maxval=bound,
                           dtype=jnp.float32)

    def ref(x, w, b):
        return jax.nn.sigmoid(x @ w.T + b)

    # 1) Small batch, lane-packed path (F=32 -> 4 rows per 128-lane vector).
    x1 = jax.random.normal(k1, (8, n_features), dtype=jnp.float32)
    p1 = logreg_forward(x1, w, b)
    jax.block_until_ready(p1)
    assert p1.shape == (8, 1)
    assert jnp.allclose(p1, ref(x1, w, b), atol=1e-5, rtol=1e-5)

    # 2) Ragged batch + multiple grid tiles (tiny target tile forces tiling,
    #    exercising the Pallas-handled ragged last block; no jnp.pad copy).
    x2 = jax.random.normal(k2, (300, n_features), dtype=jnp.float32)
    p2 = logreg_forward(x2, w, b, target_tile_bytes=16 * 1024)
    jax.block_until_ready(p2)
    assert p2.shape == (300, 1)
    assert jnp.allclose(p2, ref(x2, w, b), atol=1e-5, rtol=1e-5)

    # 3) Feature width that does not divide 128 -> unpacked fallback path.
    n_feat3 = 48
    w3 = jax.random.uniform(k_w, (1, n_feat3), minval=-bound, maxval=bound,
                            dtype=jnp.float32)
    x3 = jax.random.normal(k3, (20, n_feat3), dtype=jnp.float32)
    p3 = logreg_forward(x3, w3, b)
    jax.block_until_ready(p3)
    assert p3.shape == (20, 1)
    assert jnp.allclose(p3, ref(x3, w3, b), atol=1e-5, rtol=1e-5)

    print("KERNEL_OK")
</pallas_src>

<mosaic_0001>
module attributes {stable_mosaic.version = 11 : i64} {
  func.func @_logreg_kernel(%arg0: i32, %arg1: memref<2x128xf32, #tpu.memory_space<vmem>>, %arg2: memref<4x128xf32, #tpu.memory_space<vmem>>, %arg3: memref<1xf32, #tpu.memory_space<smem>>, %arg4: memref<1x4x2xf32, #tpu.memory_space<vmem>>) attributes {dimension_semantics = [#tpu.dimension_semantics<parallel>], iteration_bounds = array<i64: 1>, scalar_prefetch = 0 : i64, scratch_operands = 0 : i64, tpu.core_type = #tpu.core_type<tc>, window_params = [{transform_indices = @transform_0, window_bounds = array<i64: 2, 128>}, {pipeline_mode = #tpu.pipeline_mode<synchronous>, transform_indices = @transform_1, window_bounds = array<i64: 4, 128>}, {transform_indices = @transform_2, window_bounds = array<i64: 1>}, {transform_indices = @transform_3, window_bounds = array<i64: 1, 4, 2>}]} {
    %c0 = arith.constant 0 : index
    %c0_0 = arith.constant 0 : index
    %0 = vector.load %arg2[%c0, %c0_0] : memref<4x128xf32, #tpu.memory_space<vmem>>, vector<4x128xf32>
    %c0_1 = arith.constant 0 : index
    %c0_2 = arith.constant 0 : index
    %1 = vector.load %arg1[%c0_1, %c0_2] : memref<2x128xf32, #tpu.memory_space<vmem>>, vector<2x128xf32>
    %cst = arith.constant dense<0.000000e+00> : vector<4x2xf32>
    %2 = tpu.matmul %0, %1, %cst {dimension_numbers = #tpu.dot_dimension_numbers<[1], [1], [0], [0], [0, 0, 1, 0], [], []>} : vector<4x128xf32>, vector<2x128xf32>, vector<4x2xf32> -> vector<4x2xf32>
    %c0_3 = arith.constant 0 : index
    %3 = memref.load %arg3[%c0_3] : memref<1xf32, #tpu.memory_space<smem>>
    %4 = vector.broadcast %3 : f32 to vector<4x2xf32>
    %5 = arith.addf %2, %4 : vector<4x2xf32>
    %6 = arith.negf %5 : vector<4x2xf32>
    %7 = math.exp %6 : vector<4x2xf32>
    %cst_4 = arith.constant 1.000000e+00 : f32
    %8 = vector.broadcast %cst_4 : f32 to vector<4x2xf32>
    %9 = arith.addf %8, %7 : vector<4x2xf32>
    %10 = arith.divf %8, %9 : vector<4x2xf32>
    %11 = vector.shape_cast %10 : vector<4x2xf32> to vector<1x4x2xf32>
    %c0_5 = arith.constant 0 : index
    %c0_6 = arith.constant 0 : index
    %c0_7 = arith.constant 0 : index
    %12 = vector.load %arg4[%c0_5, %c0_6, %c0_7] : memref<1x4x2xf32, #tpu.memory_space<vmem>>, vector<1x4x2xf32>
    tpu.vector_store %arg4[%c0_5, %c0_6, %c0_7], %11 {strides = array<i32>} : memref<1x4x2xf32, #tpu.memory_space<vmem>>, vector<1x4x2xf32>,
    return
  }
  func.func @transform_0(%arg0: i32) -> (i32, i32) {
    %c0_i32 = arith.constant 0 : i32
    %c0_i32_0 = arith.constant 0 : i32
    return %arg0, %c0_i32 : i32, i32
  }
  func.func @transform_1(%arg0: i32) -> (i32, i32) {
    %c0_i32 = arith.constant 0 : i32
    %c0_i32_0 = arith.constant 0 : i32
    %c0_i32_1 = arith.constant 0 : i32
    return %c0_i32, %c0_i32_0 : i32, i32
  }
  func.func @transform_2(%arg0: i32) -> i32 {
    %c0_i32 = arith.constant 0 : i32
    %c0_i32_0 = arith.constant 0 : i32
    return %c0_i32 : i32
  }
  func.func @transform_3(%arg0: i32) -> (i32, i32, i32) {
    %c0_i32 = arith.constant 0 : i32
    %c0_i32_0 = arith.constant 0 : i32
    %c0_i32_1 = arith.constant 0 : i32
    return %arg0, %c0_i32, %c0_i32_0 : i32, i32, i32
  }
}

</mosaic_0001>

<llo_original>
// kernel: tpu_custom_call.1
$region0: #{tpu_custom_call.1}
  #allocation0 [shape = 'u32[]', space=smem, size = 0x4, offset = 0x4, fixed_abs, tag = 'smem constant byte address 0x4 - core index']
  #allocation1 [shape = 'u32[144,128]{1,0:T(1,128)}', space=vmem, size = 0x12000, scoped, tag = 'internal scratch']
  #allocation2 [shape = 'f32[1]{0:T(128)S(6)}', space=smem, size = 0x200, scoped, tag = 'scoped memory for tpu_custom_call.1']
  %s0 = inlined_call_operand.vmem [shape: f32[2,128], index: 0, kind: input, shape index: {}]
  %s1 = inlined_call_operand.vmem [shape: f32[4,128], index: 1, kind: input, shape index: {}]
  %s2 = inlined_call_operand.<no memory space> [shape: f32[1], index: 2, kind: input, shape index: {}]
  %s3 = inlined_call_operand.vmem [shape: f32[1,4,2], index: 3, kind: output, shape index: {}]
  %s4 = sld [smem:[#allocation0]]
  $region22: #{tpu_custom_call.1} parent=0
    _
  %s6 = ssub.s32 1, %s4
  %s7 = scalar_select 0, %s6, %s4
  %8 = sst [smem:[#allocation2]] %s2
  // Predicated region
  $region2: #{tpu_custom_call.1} parent=0 // pred_check
    _
  $region3: #{tpu_custom_call.1} parent=0 // pred_check_branch
    %10 = sbr.rel (0) target = $region5
  $region4: #{tpu_custom_call.1} parent=0 // pred_region
    _
  $region5: #{tpu_custom_call.1} parent=0 // pred_fallthru
    _
  // Predicated region
  $region6: #{tpu_custom_call.1} parent=0 // pred_check
    _
  $region7: #{tpu_custom_call.1} parent=0 // pred_check_branch
    %12 = sbr.rel (0) target = $region9
  $region8: #{tpu_custom_call.1} parent=0 // pred_region
    _
  $region9: #{tpu_custom_call.1} parent=0 // pred_fallthru
    _
  // Predicated region
  $region10: #{tpu_custom_call.1} parent=0 // pred_check
    _
  $region11: #{tpu_custom_call.1} parent=0 // pred_check_branch
    %14 = sbr.rel (0) target = $region13
  $region12: #{tpu_custom_call.1} parent=0 // pred_region
    _
  $region13: #{tpu_custom_call.1} parent=0 // pred_fallthru
    _
  %v15 = vld [vmem:[%s1] sm:$0xf]
  %v16 = vld [vmem:[%s0] sm:$0x3]
  %s17 = sld [smem:[#allocation2]]
  %v18 = vstv %s17
  %19 = vmatprep.subr.mxu0 0.0
  %20 = vmatpush1.xpose.msra.mxu0 %v16
  %21 = vmatprep.subr.mxu0 0.0
  %22 = vmatpush1.xpose.msra.mxu0 0.0
  %23 = vmatprep.subr.mxu0 0.0
  %24 = vmatpush1.xpose.msra.mxu0 0.0
  %25 = vmatprep.subr.mxu0 0.0
  %26 = vmatpush1.xpose.msra.mxu0 0.0
  %27 = vmatprep.subr.mxu0 0.0
  %28 = vmatpush1.xpose.msra.mxu0 0.0
  %29 = vmatprep.subr.mxu0 0.0
  %30 = vmatpush1.xpose.msra.mxu0 0.0
  %31 = vmatprep.subr.mxu0 0.0
  %32 = vmatpush1.xpose.msra.mxu0 0.0
  %33 = vmatprep.subr.mxu0 0.0
  %34 = vmatpush1.xpose.msra.mxu0 0.0
  %35 = vmatprep.subr.mxu0 0.0
  %36 = vmatpush1.xpose.msra.mxu0 0.0
  %37 = vmatprep.subr.mxu0 0.0
  %38 = vmatpush1.xpose.msra.mxu0 0.0
  %39 = vmatprep.subr.mxu0 0.0
  %40 = vmatpush1.xpose.msra.mxu0 0.0
  %41 = vmatprep.subr.mxu0 0.0
  %42 = vmatpush1.xpose.msra.mxu0 0.0
  %43 = vmatprep.subr.mxu0 0.0
  %44 = vmatpush1.xpose.msra.mxu0 0.0
  %45 = vmatprep.subr.mxu0 0.0
  %46 = vmatpush1.xpose.msra.mxu0 0.0
  %47 = vmatprep.subr.mxu0 0.0
  %48 = vmatpush1.xpose.msra.mxu0 0.0
  %49 = vmatprep.subr.mxu0 0.0
  %50 = vmatpush1.xpose.msra.mxu0 0.0
  %51 = vmatprep.subr.mxu0 0.0
  %52 = vmatpush1.xpose.msra.mxu0 0.0
  %53 = vmatprep.subr.mxu0 0.0
  %54 = vmatpush1.xpose.msra.mxu0 0.0
  %55 = vmatprep.subr.mxu0 0.0
  %56 = vmatpush1.xpose.msra.mxu0 0.0
  %57 = vmatprep.subr.mxu0 0.0
  %58 = vmatpush1.xpose.msra.mxu0 0.0
  %59 = vmatprep.subr.mxu0 0.0
  %60 = vmatpush1.xpose.msra.mxu0 0.0
  %61 = vmatprep.subr.mxu0 0.0
  %62 = vmatpush1.xpose.msra.mxu0 0.0
  %63 = vmatprep.subr.mxu0 0.0
  %64 = vmatpush1.xpose.msra.mxu0 0.0
  %65 = vmatprep.subr.mxu0 0.0
  %66 = vmatpush1.xpose.msra.mxu0 0.0
  %67 = vmatprep.subr.mxu0 0.0
  %68 = vmatpush1.xpose.msra.mxu0 0.0
  %69 = vmatprep.subr.mxu0 0.0
  %70 = vmatpush1.xpose.msra.mxu0 0.0
  %71 = vmatprep.subr.mxu0 0.0
  %72 = vmatpush1.xpose.msra.mxu0 0.0
  %73 = vmatprep.subr.mxu0 0.0
  %74 = vmatpush1.xpose.msra.mxu0 0.0
  %75 = vmatprep.subr.mxu0 0.0
  %76 = vmatpush1.xpose.msra.mxu0 0.0
  %77 = vmatprep.subr.mxu0 0.0
  %78 = vmatpush1.xpose.msra.mxu0 0.0
  %79 = vmatprep.subr.mxu0 0.0
  %80 = vmatpush1.xpose.msra.mxu0 0.0
  %81 = vmatprep.subr.mxu0 0.0
  %82 = vmatpush1.xpose.msra.mxu0 0.0
  %83 = vmatprep.mubr.f32.mxu0 0.0
  %84 = vmatmul.mubr.f32.gmra.mrb[0].mxu0 %v15
  %v85 = vpop.f32.mrb[0].mxu0
  %v86 = vadd.f32 %v18, %v85
  %v87 = vpop.f32.mrb[0].mxu0
  %88 = vdwg.mxu0
  %v89 = vxor.u32 %v86, 2147483648
  %v90 = vmul.f32 %v89, 1.442695
  %v91 = vpow.pop %v90
  %v92 = vadd.f32 %v91, 1.0
  %v93 = vrcp.pop %v92
  %v94 = vmul.f32 1.0, %v93
  %vm95 = vcmask 11264
  %96 = vst.msk [vmem:[%s3] sm:$0xf] %vm95, %v94
  // Predicated region
  $region14: #{tpu_custom_call.1} parent=0 // pred_check
    _
  $region15: #{tpu_custom_call.1} parent=0 // pred_check_branch
    %98 = sbr.rel (0) target = $region17
  $region16: #{tpu_custom_call.1} parent=0 // pred_region
    _
  $region17: #{tpu_custom_call.1} parent=0 // pred_fallthru
    _
  // Predicated region
  $region18: #{tpu_custom_call.1} parent=0 // pred_check
    _
  $region19: #{tpu_custom_call.1} parent=0 // pred_check_branch
    %100 = sbr.rel (0) target = $region21
  $region20: #{tpu_custom_call.1} parent=0 // pred_region
    _
  $region21: #{tpu_custom_call.1} parent=0 // pred_fallthru
    _

</llo_original>
